<compile_context>
chip_gen: v6e
topology: v6e:2x2x1
jax: 0.10.0
libtpu: 0.0.40
codegen_flags: <defaults>
</compile_context>

<pallas_src>
import functools

import jax
import jax.numpy as jnp
from jax.experimental import pallas as pl
from jax.experimental.pallas import tpu as pltpu

LANES = 128
CHUNK_ROWS = 256                       # inner-loop chunk (128 KiB of f32 per array)
TARGET_TILE_BYTES = 4 * 1024 * 1024    # ~4 MiB per input tile (HBM-roofline sized)
VMEM_LIMIT_BYTES = 32 * 1024 * 1024    # 2 inputs x 2 buffers x 4 MiB + slack; safe on v7x (64 MiB phys)


def _chunk_partials(t, o):
    """(n,128) f32 chunks -> three (8,128) vreg partial sums.

    Common case (n % 8 == 0): pure VPU vreg-wise adds, no cross-lane work.
    """
    n = t.shape[0]

    def vsum(x):
        if n % 8 == 0:
            return jnp.sum(x.reshape(n // 8, 8, LANES), axis=0)
        # Rare ragged-sublane case (single full-extent block only): put the
        # column sums in sublane 0 so the host-side combine stays exact.
        s = jnp.sum(x, axis=0, keepdims=True)               # (1, LANES)
        row = jax.lax.broadcasted_iota(jnp.int32, (8, LANES), 0)
        return jnp.where(row == 0, jnp.broadcast_to(s, (8, LANES)), 0.0)

    return vsum(o * t), vsum(o), vsum(t)


def _dice_partial_kernel(t_ref, o_ref, out_ref, *, rows, block_rows, need_mask):
    """Per grid step: emit vreg-shaped partials [inter, sum(out), sum(tgt)]."""
    i = pl.program_id(0)

    def reduce_tile(mask_rows):
        n_chunks = block_rows // CHUNK_ROWS
        rem = block_rows % CHUNK_ROWS

        def load(r0, n):
            t = t_ref[pl.ds(r0, n), :].astype(jnp.float32)
            o = o_ref[pl.ds(r0, n), :].astype(jnp.float32)
            if mask_rows:
                rid = jax.lax.broadcasted_iota(jnp.int32, (n, LANES), 0)
                valid = (i * block_rows + r0 + rid) < rows
                t = jnp.where(valid, t, 0.0)
                o = jnp.where(valid, o, 0.0)
            return t, o

        acc = (jnp.zeros((8, LANES), jnp.float32),
               jnp.zeros((8, LANES), jnp.float32),
               jnp.zeros((8, LANES), jnp.float32))

        if n_chunks > 0:
            def body(c, carry):
                ai, ao, at = carry
                t, o = load(c * CHUNK_ROWS, CHUNK_ROWS)
                pi, po, pt = _chunk_partials(t, o)
                return ai + pi, ao + po, at + pt

            acc = jax.lax.fori_loop(0, n_chunks, body, acc, unroll=True)

        if rem > 0:
            t, o = load(n_chunks * CHUNK_ROWS, rem)
            pi, po, pt = _chunk_partials(t, o)
            acc = (acc[0] + pi, acc[1] + po, acc[2] + pt)

        return acc

    def write(acc):
        out_ref[0:8, :] = acc[0]      # intersection partial
        out_ref[8:16, :] = acc[1]     # sum(output) partial
        out_ref[16:24, :] = acc[2]    # sum(target) partial

    if need_mask:
        last = pl.num_programs(0) - 1

        @pl.when(i != last)
        def _():
            write(reduce_tile(False))   # steady state: no mask cost

        @pl.when(i == last)
        def _():
            write(reduce_tile(True))    # only the tail block pays the mask
    else:
        write(reduce_tile(False))


def loss_dice(target, output, smooth=1.0):
    """Pallas TPU implementation of LossDice.forward(target, output)."""
    assert target.shape == output.shape, "target/output shape mismatch"

    t_flat = target.reshape(-1)
    o_flat = output.reshape(-1)
    numel = t_flat.shape[0]
    main = (numel // LANES) * LANES
    tail = numel - main
    smooth = jnp.float32(smooth)

    if main == 0:
        # Fewer than 128 elements: a kernel launch cannot pay for itself.
        o = o_flat.astype(jnp.float32)
        t = t_flat.astype(jnp.float32)
        inter = jnp.sum(o * t)
        return 1.0 - (2.0 * inter + smooth) / (jnp.sum(o) + jnp.sum(t) + smooth)

    if tail:
        # TODO(synk): the prefix slice still costs one contiguous copy in XLA;
        # a manual-DMA (memory_space=pl.ANY) path could avoid even that.
        t_main = jax.lax.slice(t_flat, (0,), (main,))
        o_main = jax.lax.slice(o_flat, (0,), (main,))
    else:
        t_main, o_main = t_flat, o_flat

    t2d = t_main.reshape(-1, LANES)
    o2d = o_main.reshape(-1, LANES)
    rows = t2d.shape[0]

    # Byte-based, dtype-aware tile sizing.
    itemsize = max(target.dtype.itemsize, output.dtype.itemsize)
    packing = max(1, 4 // itemsize)
    sub_mult = 8 * packing                      # sublane packing multiple
    max_block_rows = max(
        sub_mult,
        (TARGET_TILE_BYTES // (LANES * itemsize)) // sub_mult * sub_mult)

    if rows < 2 * sub_mult:
        block_rows = rows                       # full-extent block: always legal
        grid_len = 1
    else:
        # At least 2 grid steps so both v7x TensorCores get work; tiles capped
        # by bytes, rounded to the sublane-packing multiple.
        half = pl.cdiv(rows, 2)
        block_rows = min(max_block_rows, pl.cdiv(half, sub_mult) * sub_mult)
        grid_len = pl.cdiv(rows, block_rows)
    need_mask = (rows % block_rows) != 0

    kernel = functools.partial(
        _dice_partial_kernel,
        rows=rows,
        block_rows=block_rows,
        need_mask=need_mask,
    )

    cost = pl.CostEstimate(
        flops=4 * rows * LANES,
        transcendentals=0,
        bytes_accessed=rows * LANES * (target.dtype.itemsize
                                       + output.dtype.itemsize)
                       + grid_len * 24 * LANES * 4,
    )

    partials = pl.pallas_call(
        kernel,
        out_shape=jax.ShapeDtypeStruct((grid_len * 24, LANES), jnp.float32),
        grid_spec=pltpu.PrefetchScalarGridSpec(
            num_scalar_prefetch=0,
            grid=(grid_len,),
            in_specs=[
                pl.BlockSpec((block_rows, LANES), lambda i: (i, 0)),
                pl.BlockSpec((block_rows, LANES), lambda i: (i, 0)),
            ],
            out_specs=pl.BlockSpec((24, LANES), lambda i: (i, 0)),
        ),
        compiler_params=pltpu.CompilerParams(
            dimension_semantics=("parallel",),
            vmem_limit_bytes=VMEM_LIMIT_BYTES,
        ),
        cost_estimate=cost,
    )(t2d, o2d)

    # Tiny combine: one reduction over (grid, 3, 8, 128).
    sums = partials.reshape(grid_len, 3, 8, LANES).sum(axis=(0, 2, 3))
    inter, s_out, s_tgt = sums[0], sums[1], sums[2]

    if tail:
        # Ragged tail (< 128 elements): plain-JAX sums folded into the combine.
        o_t = jax.lax.slice(o_flat, (main,), (numel,)).astype(jnp.float32)
        t_t = jax.lax.slice(t_flat, (main,), (numel,)).astype(jnp.float32)
        inter = inter + jnp.sum(o_t * t_t)
        s_out = s_out + jnp.sum(o_t)
        s_tgt = s_tgt + jnp.sum(t_t)

    return 1.0 - (2.0 * inter + smooth) / (s_out + s_tgt + smooth)


def loss_dice_ref(target, output, smooth=1.0):
    """Pure-JAX reference mirroring the PyTorch forward exactly."""
    o = output.reshape(-1).astype(jnp.float32)
    t = target.reshape(-1).astype(jnp.float32)
    inter = jnp.sum(o * t)
    return 1.0 - (2.0 * inter + smooth) / (jnp.sum(o) + jnp.sum(t) + smooth)


if __name__ == "__main__":
    key = jax.random.PRNGKey(0)
    k1, k2 = jax.random.split(key)

    # NCHW, small shapes: batch=2, channels=4, spatial=16x16
    target = jax.random.uniform(k1, (2, 4, 16, 16), dtype=jnp.float32)
    output = jax.random.uniform(k2, (2, 4, 16, 16), dtype=jnp.float32)

    loss = loss_dice(target, output, smooth=1.0)
    loss = jax.block_until_ready(loss)

    ref = loss_dice_ref(target, output, smooth=1.0)
    assert jnp.allclose(loss, ref, rtol=1e-5, atol=1e-6), (loss, ref)

    print("KERNEL_OK")
</pallas_src>

<mosaic_0001>
module attributes {stable_mosaic.version = 11 : i64} {
  func.func @_dice_partial_kernel(%arg0: i32, %arg1: memref<8x128xf32, #tpu.memory_space<vmem>>, %arg2: memref<8x128xf32, #tpu.memory_space<vmem>>, %arg3: memref<24x128xf32, #tpu.memory_space<vmem>>) attributes {dimension_semantics = [#tpu.dimension_semantics<parallel>], iteration_bounds = array<i64: 2>, scalar_prefetch = 0 : i64, scratch_operands = 0 : i64, tpu.core_type = #tpu.core_type<tc>, window_params = [{transform_indices = @transform_0, window_bounds = array<i64: 8, 128>}, {transform_indices = @transform_1, window_bounds = array<i64: 8, 128>}, {transform_indices = @transform_2, window_bounds = array<i64: 24, 128>}]} {
    %cst = arith.constant 0.000000e+00 : f32
    %0 = vector.broadcast %cst : f32 to vector<8x128xf32>
    %cst_0 = arith.constant 0.000000e+00 : f32
    %1 = vector.broadcast %cst_0 : f32 to vector<8x128xf32>
    %cst_1 = arith.constant 0.000000e+00 : f32
    %2 = vector.broadcast %cst_1 : f32 to vector<8x128xf32>
    %c0 = arith.constant 0 : index
    %c0_2 = arith.constant 0 : index
    %3 = vector.load %arg1[%c0, %c0_2] : memref<8x128xf32, #tpu.memory_space<vmem>>, vector<8x128xf32>
    %c0_3 = arith.constant 0 : index
    %c0_4 = arith.constant 0 : index
    %4 = vector.load %arg2[%c0_3, %c0_4] : memref<8x128xf32, #tpu.memory_space<vmem>>, vector<8x128xf32>
    %5 = arith.mulf %4, %3 : vector<8x128xf32>
    %6 = vector.shape_cast %5 : vector<8x128xf32> to vector<1x8x128xf32>
    %cst_5 = arith.constant dense<0.000000e+00> : vector<8x128xf32>
    %7 = vector.multi_reduction <add>, %6, %cst_5 [0] : vector<1x8x128xf32> to vector<8x128xf32>
    %8 = vector.shape_cast %4 : vector<8x128xf32> to vector<1x8x128xf32>
    %cst_6 = arith.constant dense<0.000000e+00> : vector<8x128xf32>
    %9 = vector.multi_reduction <add>, %8, %cst_6 [0] : vector<1x8x128xf32> to vector<8x128xf32>
    %10 = vector.shape_cast %3 : vector<8x128xf32> to vector<1x8x128xf32>
    %cst_7 = arith.constant dense<0.000000e+00> : vector<8x128xf32>
    %11 = vector.multi_reduction <add>, %10, %cst_7 [0] : vector<1x8x128xf32> to vector<8x128xf32>
    %12 = arith.addf %0, %7 : vector<8x128xf32>
    %13 = arith.addf %1, %9 : vector<8x128xf32>
    %14 = arith.addf %2, %11 : vector<8x128xf32>
    %c0_8 = arith.constant 0 : index
    %c0_9 = arith.constant 0 : index
    %15 = vector.load %arg3[%c0_8, %c0_9] : memref<24x128xf32, #tpu.memory_space<vmem>>, vector<8x128xf32>
    tpu.vector_store %arg3[%c0_8, %c0_9], %12 {strides = array<i32>} : memref<24x128xf32, #tpu.memory_space<vmem>>, vector<8x128xf32>,
    %c8 = arith.constant 8 : index
    %c0_10 = arith.constant 0 : index
    %16 = vector.load %arg3[%c8, %c0_10] : memref<24x128xf32, #tpu.memory_space<vmem>>, vector<8x128xf32>
    tpu.vector_store %arg3[%c8, %c0_10], %13 {strides = array<i32>} : memref<24x128xf32, #tpu.memory_space<vmem>>, vector<8x128xf32>,
    %c16 = arith.constant 16 : index
    %c0_11 = arith.constant 0 : index
    %17 = vector.load %arg3[%c16, %c0_11] : memref<24x128xf32, #tpu.memory_space<vmem>>, vector<8x128xf32>
    tpu.vector_store %arg3[%c16, %c0_11], %14 {strides = array<i32>} : memref<24x128xf32, #tpu.memory_space<vmem>>, vector<8x128xf32>,
    return
  }
  func.func @transform_0(%arg0: i32) -> (i32, i32) {
    %c0_i32 = arith.constant 0 : i32
    %c0_i32_0 = arith.constant 0 : i32
    return %arg0, %c0_i32 : i32, i32
  }
  func.func @transform_1(%arg0: i32) -> (i32, i32) {
    %c0_i32 = arith.constant 0 : i32
    %c0_i32_0 = arith.constant 0 : i32
    return %arg0, %c0_i32 : i32, i32
  }
  func.func @transform_2(%arg0: i32) -> (i32, i32) {
    %c0_i32 = arith.constant 0 : i32
    %c0_i32_0 = arith.constant 0 : i32
    return %arg0, %c0_i32 : i32, i32
  }
}

</mosaic_0001>

<llo_original>
// kernel: tpu_custom_call.1
$region0: #{tpu_custom_call.1}
  #allocation0 [shape = 'u32[]', space=smem, size = 0x4, offset = 0x4, fixed_abs, tag = 'smem constant byte address 0x4 - core index']
  #allocation1 [shape = 'u32[144,128]{1,0:T(1,128)}', space=vmem, size = 0x12000, scoped, tag = 'internal scratch']
  %s0 = inlined_call_operand.hbm [shape: f32[16,128], index: 0, kind: input, shape index: {}]
  %s1 = inlined_call_operand.hbm [shape: f32[16,128], index: 1, kind: input, shape index: {}]
  %s2 = inlined_call_operand.hbm [shape: f32[48,128], index: 2, kind: output, shape index: {}]
  %s3 = sld [smem:[#allocation0]]
  $region49: #{tpu_custom_call.1} parent=0
    _
  %s5 = ssub.s32 1, %s3
  %s6 = scalar_select 0, %s5, %s3
  $region1: #{tpu_custom_call.1} parent=0
    #allocation2 [shape = 'u8[8192]{0}', space=vmem, size = 0x2000, scoped, tag = 'input window, operand 0']
    #allocation3 [shape = 's32[2]{0}', space=sflag, size = 0x8, scoped, tag = 'scoped memory for tpu_custom_call.1']
    #allocation4 [shape = 's32[2]{0}', space=sflag, size = 0x8, scoped, tag = 'scoped memory for tpu_custom_call.1']
    #allocation5 [shape = 'u8[8192]{0}', space=vmem, size = 0x2000, scoped, tag = 'input window, operand 1']
    #allocation6 [shape = 's32[2]{0}', space=sflag, size = 0x8, scoped, tag = 'scoped memory for tpu_custom_call.1']
    #allocation7 [shape = 'u8[24576]{0}', space=vmem, size = 0x6000, scoped, tag = 'output window, operand 0']
    %7 = vsyncpa [#allocation3], 0
    %s8 = scalar_lea.sflag [#allocation3], 1
    %9 = vsyncpa %s8, 0
    %10 = vsyncpa [#allocation6], 0
    %s11 = scalar_lea.sflag [#allocation6], 1
    %12 = vsyncpa %s11, 0
    %13 = vsyncpa [#allocation4], 0
    %s14 = scalar_lea.sflag [#allocation4], 1
    %15 = vsyncpa %s14, 0
    loop: start=0, step=1, limit=4
    $region2: #{tpu_custom_call.1} parent=1 // loop_pre_header
      _
    $region3: #{tpu_custom_call.1} parent=1 // loop_header
      %s17 = sphi 0, %s21
      %p18 = scmp.ge.s32.totalorder %s17, 4
      %s27 = sphi 0, %s29
      %s30 = sphi 0, %s27
      %s31 = sphi 0, %s30
      %s47 = sphi 0, %s31
      %s53 = sphi 0, %s55
      %s56 = sphi 0, %s53
      %s57 = sphi 0, %s56
      %s73 = sphi 0, %s57
      %s79 = sphi 0, %s81
      %s82 = sphi 0, %s79
      %s83 = sphi 0, %s82
      %s99 = sphi 0, %s83
    $region4: #{tpu_custom_call.1} parent=1 // loop_header_branch
      %20 = sbr.rel (%p18) target = $region8
    $region5: #{tpu_custom_call.1} parent=1 // loop_body
      %s22 = ssub.s32 %s17, 1
      %s23 = ssub.s32 %s17, 2
      %s24 = sadd.s32 %s17, 1
      %s25 = ssub.s32 %s17, %s24
      %p26 = scmp.eq.s32.totalorder %s25, 0
      %s28 = sadd.s32 %s27, 1
      %s29 = scalar_select %p26, %s27, %s28
      %p32 = pneg %p26
      %p33 = scmp.eq.s32.totalorder %s17, 1
      %p34 = por %p32, %p33
      %p35 = scmp.ne.s32.totalorder %s27, %s30
      %p36 = scmp.eq.s32.totalorder %s17, 0
      %p37 = por %p35, %p36
      %p38 = scmp.ne.s32.totalorder %s27, %s30
      %p39 = scmp.eq.s32.totalorder %s22, 1
      %p40 = por %p38, %p39
      %p41 = scmp.ne.s32.totalorder %s30, %s31
      %p42 = scmp.eq.s32.totalorder %s22, 0
      %p43 = por %p41, %p42
      %p44 = scmp.ne.s32.totalorder %s30, %s31
      %p45 = scmp.eq.s32.totalorder %s23, 1
      %p46 = por %p44, %p45
      %p48 = scmp.ne.s32.totalorder %s31, %s47
      %p49 = scmp.eq.s32.totalorder %s23, 0
      %p50 = por %p48, %p49
      %s51 = ssub.s32 %s17, %s24
      %p52 = scmp.eq.s32.totalorder %s51, 0
      %s54 = sadd.s32 %s53, 1
      %s55 = scalar_select %p52, %s53, %s54
      %p58 = pneg %p52
      %p59 = scmp.eq.s32.totalorder %s17, 1
      %p60 = por %p58, %p59
      %p61 = scmp.ne.s32.totalorder %s53, %s56
      %p62 = scmp.eq.s32.totalorder %s17, 0
      %p63 = por %p61, %p62
      %p64 = scmp.ne.s32.totalorder %s53, %s56
      %p65 = scmp.eq.s32.totalorder %s22, 1
      %p66 = por %p64, %p65
      %p67 = scmp.ne.s32.totalorder %s56, %s57
      %p68 = scmp.eq.s32.totalorder %s22, 0
      %p69 = por %p67, %p68
      %p70 = scmp.ne.s32.totalorder %s56, %s57
      %p71 = scmp.eq.s32.totalorder %s23, 1
      %p72 = por %p70, %p71
      %p74 = scmp.ne.s32.totalorder %s57, %s73
      %p75 = scmp.eq.s32.totalorder %s23, 0
      %p76 = por %p74, %p75
      %s77 = ssub.s32 %s17, %s24
      %p78 = scmp.eq.s32.totalorder %s77, 0
      %s80 = sadd.s32 %s79, 1
      %s81 = scalar_select %p78, %s79, %s80
      %p84 = pneg %p78
      %p85 = scmp.eq.s32.totalorder %s17, 1
      %p86 = por %p84, %p85
      %p87 = scmp.ne.s32.totalorder %s79, %s82
      %p88 = scmp.eq.s32.totalorder %s17, 0
      %p89 = por %p87, %p88
      %p90 = scmp.ne.s32.totalorder %s79, %s82
      %p91 = scmp.eq.s32.totalorder %s22, 1
      %p92 = por %p90, %p91
      %p93 = scmp.ne.s32.totalorder %s82, %s83
      %p94 = scmp.eq.s32.totalorder %s22, 0
      %p95 = por %p93, %p94
      %p96 = scmp.ne.s32.totalorder %s82, %s83
      %p97 = scmp.eq.s32.totalorder %s23, 1
      %p98 = por %p96, %p97
      %p100 = scmp.ne.s32.totalorder %s83, %s99
      %p101 = scmp.eq.s32.totalorder %s23, 0
      %p102 = por %p100, %p101
      %p103 = scmp.le.s32.totalorder 1, %s17
      %p104 = scmp.lt.s32.totalorder %s17, 3
      %p105 = pnand %p103, %p104
      %p106 = pneg %p105
      // Predicated region
      $region9: #{tpu_custom_call.1} parent=5 // pred_check
        _
      $region10: #{tpu_custom_call.1} parent=5 // pred_check_branch
        %108 = sbr.rel (%p105) target = $region12
      $region11: #{tpu_custom_call.1} parent=5 // pred_region
        %s109 = ssub.s32 %s17, 1
      $region12: #{tpu_custom_call.1} parent=5 // pred_fallthru
        _
      %p110 = scmp.lt.s32.totalorder %s17, 2
      // Predicated region
      $region13: #{tpu_custom_call.1} parent=5 // pred_check
        %p111 = pneg %p110
      $region14: #{tpu_custom_call.1} parent=5 // pred_check_branch
        %113 = sbr.rel (%p111) target = $region16
      $region15: #{tpu_custom_call.1} parent=5 // pred_region
        // Predicated region
        $region17: #{tpu_custom_call.1} parent=15 // pred_check
          %p114 = pneg %p37
        $region18: #{tpu_custom_call.1} parent=15 // pred_check_branch
          %116 = sbr.rel (%p114) target = $region20
        $region19: #{tpu_custom_call.1} parent=15 // pred_region
          %s117 = sand.u32 %s27, 1
          %s118 = scalar_lea.sflag [#allocation3], %s117
          %s119 = sand.u32 %s27, 1
          %s120 = smul.addr %s119, 8
          %s121 = scalar_lea.vmem [#allocation2], %s120
          %s123 = ssub.s32 128, 128
          %124 = vsyncadd %s118, %s123
          %s125 = smul.addr %s17, 128
          %s126 = scalar_lea.hbm %s0, %s125
          %s128 = sshll.u32 %s121, 4
          %s129 = int_to_ptr.vmem [resolvable:$true] %s128
          %131 = dma.hbm_to_vmem [thread:$0]  %s126, 128, %s129, %s118
        $region20: #{tpu_custom_call.1} parent=15 // pred_fallthru
          _
        // Predicated region
        $region21: #{tpu_custom_call.1} parent=15 // pred_check
          %p132 = pneg %p63
        $region22: #{tpu_custom_call.1} parent=15 // pred_check_branch
          %134 = sbr.rel (%p132) target = $region24
        $region23: #{tpu_custom_call.1} parent=15 // pred_region
          %s135 = sand.u32 %s53, 1
          %s136 = scalar_lea.sflag [#allocation6], %s135
          %s137 = sand.u32 %s53, 1
          %s138 = smul.addr %s137, 8
          %s139 = scalar_lea.vmem [#allocation5], %s138
          %s141 = ssub.s32 128, 128
          %142 = vsyncadd %s136, %s141
          %s143 = smul.addr %s17, 128
          %s144 = scalar_lea.hbm %s1, %s143
          %s146 = sshll.u32 %s139, 4
          %s147 = int_to_ptr.vmem [resolvable:$true] %s146
          %149 = dma.hbm_to_vmem [thread:$0]  %s144, 128, %s147, %s136
        $region24: #{tpu_custom_call.1} parent=15 // pred_fallthru
          _
      $region16: #{tpu_custom_call.1} parent=5 // pred_fallthru
        _
      %p150 = scmp.le.s32.totalorder 1, %s17
      %p151 = scmp.lt.s32.totalorder %s17, 3
      %p152 = pnand %p150, %p151
      %p153 = pneg %p152
      // Predicated region
      $region25: #{tpu_custom_call.1} parent=5 // pred_check
        _
      $region26: #{tpu_custom_call.1} parent=5 // pred_check_branch
        %155 = sbr.rel (%p152) target = $region28
      $region27: #{tpu_custom_call.1} parent=5 // pred_region
        %s156 = ssub.s32 %s17, 1
        %s157 = sand.u32 %s30, 1
        %s158 = scalar_lea.sflag [#allocation3], %s157
        %s159 = sand.u32 %s30, 1
        %s160 = smul.addr %s159, 8
        %s161 = scalar_lea.vmem [#allocation2], %s160
        // Predicated region
        $region29: #{tpu_custom_call.1} parent=27 // pred_check
          %p162 = pneg %p43
        $region30: #{tpu_custom_call.1} parent=27 // pred_check_branch
          %164 = sbr.rel (%p162) target = $region32
        $region31: #{tpu_custom_call.1} parent=27 // pred_region
          %165 = dma.done %s158, 128
        $region32: #{tpu_custom_call.1} parent=27 // pred_fallthru
          _
        %s166 = sand.u32 %s56, 1
        %s167 = scalar_lea.sflag [#allocation6], %s166
        %s168 = sand.u32 %s56, 1
        %s169 = smul.addr %s168, 8
        %s170 = scalar_lea.vmem [#allocation5], %s169
        // Predicated region
        $region33: #{tpu_custom_call.1} parent=27 // pred_check
          %p171 = pneg %p69
        $region34: #{tpu_custom_call.1} parent=27 // pred_check_branch
          %173 = sbr.rel (%p171) target = $region36
        $region35: #{tpu_custom_call.1} parent=27 // pred_region
          %174 = dma.done %s167, 128
        $region36: #{tpu_custom_call.1} parent=27 // pred_fallthru
          _
        %s175 = sand.u32 %s30, 1
        %s176 = scalar_lea.sflag [#allocation3], %s175
        %s177 = sand.u32 %s30, 1
        %s178 = smul.addr %s177, 8
        %s179 = scalar_lea.vmem [#allocation2], %s178
        %p180 = pneg %p43
        %p181 = pneg %p40
        %s182 = sand.u32 %s56, 1
        %s183 = scalar_lea.sflag [#allocation6], %s182
        %s184 = sand.u32 %s56, 1
        %s185 = smul.addr %s184, 8
        %s186 = scalar_lea.vmem [#allocation5], %s185
        %p187 = pneg %p69
        %p188 = pneg %p66
        %p189 = pneg %p95
        %p190 = pneg %p92
        %s191 = sand.u32 %s82, 1
        %s192 = scalar_lea.sflag [#allocation4], %s191
        %s193 = sand.u32 %s82, 1
        %s194 = smul.addr %s193, 24
        %s195 = scalar_lea.vmem [#allocation7], %s194
        %s196 = smul.u32 3, %s22
        %v197 = vld [vmem:[%s161] sm:$0xff]
        %v198 = vld [vmem:[%s170] sm:$0xff]
        %v199 = vmul.f32 %v198, %v197
        %v200 = vadd.f32 %v199, 0.0
        %v201 = vadd.f32 %v198, 0.0
        %v202 = vadd.f32 %v197, 0.0
        %v203 = vadd.f32 %v200, 0.0
        %v204 = vadd.f32 %v201, 0.0
        %v205 = vadd.f32 %v202, 0.0
        %206 = vst [vmem:[%s195] sm:$0xff] %v203
        %207 = vst [vmem:[%s195 + $0x8] sm:$0xff] %v204
        %208 = vst [vmem:[%s195 + $0x10] sm:$0xff] %v205
        %s209 = sand.u32 %s82, 1
        %s210 = scalar_lea.sflag [#allocation4], %s209
        %s211 = sand.u32 %s82, 1
        %s212 = smul.addr %s211, 24
        %s213 = scalar_lea.vmem [#allocation7], %s212
        // Predicated region
        $region37: #{tpu_custom_call.1} parent=27 // pred_check
          %p214 = pneg %p92
        $region38: #{tpu_custom_call.1} parent=27 // pred_check_branch
          %216 = sbr.rel (%p214) target = $region40
        $region39: #{tpu_custom_call.1} parent=27 // pred_region
          %s217 = smul.u32 3, %s22
          %s219 = ssub.s32 384, 384
          %220 = vsyncadd %s210, %s219
          %s221 = smul.addr %s217, 128
          %s222 = scalar_lea.hbm %s2, %s221
          %s223 = sshll.u32 %s213, 4
          %s224 = int_to_ptr.vmem [resolvable:$true] %s223
          %229 = dma.vmem_to_hbm [thread:$0]  %s224, 384, %s222, %s210, 128, 128, 8
        $region40: #{tpu_custom_call.1} parent=27 // pred_fallthru
          _
      $region28: #{tpu_custom_call.1} parent=5 // pred_fallthru
        _
      %p230 = scmp.le.s32.totalorder 2, %s17
      // Predicated region
      $region41: #{tpu_custom_call.1} parent=5 // pred_check
        %p231 = pneg %p230
      $region42: #{tpu_custom_call.1} parent=5 // pred_check_branch
        %233 = sbr.rel (%p231) target = $region44
      $region43: #{tpu_custom_call.1} parent=5 // pred_region
        %s234 = ssub.s32 %s17, 2
        // Predicated region
        $region45: #{tpu_custom_call.1} parent=43 // pred_check
          %p235 = pneg %p98
        $region46: #{tpu_custom_call.1} parent=43 // pred_check_branch
          %237 = sbr.rel (%p235) target = $region48
        $region47: #{tpu_custom_call.1} parent=43 // pred_region
          %s238 = sand.u32 %s83, 1
          %s239 = scalar_lea.sflag [#allocation4], %s238
          %s240 = sand.u32 %s83, 1
          %s241 = smul.addr %s240, 24
          %s242 = scalar_lea.vmem [#allocation7], %s241
          %243 = dma.done %s239, 384
        $region48: #{tpu_custom_call.1} parent=43 // pred_fallthru
          _
      $region44: #{tpu_custom_call.1} parent=5 // pred_fallthru
        _
    $region6: #{tpu_custom_call.1} parent=1 // loop_footer
      %s21 = sadd.s32 1, %s17
    $region7: #{tpu_custom_call.1} parent=1 // loop_footer_branch
      %16 = sbr.rel target = $region3
    $region8: #{tpu_custom_call.1} parent=1 // loop_exit
      _
    %244 = vsyncpa [#allocation3], 1
    %s245 = scalar_lea.sflag [#allocation3], 1
    %246 = vsyncpa %s245, 1
    %247 = vsyncpa [#allocation6], 1
    %s248 = scalar_lea.sflag [#allocation6], 1
    %249 = vsyncpa %s248, 1
    %250 = vsyncpa [#allocation4], 1
    %s251 = scalar_lea.sflag [#allocation4], 1
    %252 = vsyncpa %s251, 1

</llo_original>
